<compile_context>
chip_gen: v7x
topology: tpu7x:2x2x1
jax: 0.10.0
libtpu: 0.0.40
codegen_flags: <defaults>
</compile_context>

<pallas_src>
import math

import jax
import jax.numpy as jnp
from jax import lax
from jax.experimental import pallas as pl
from jax.experimental.pallas import tpu as pltpu


def _round_up(x, m):
    return -(-x // m) * m


# ----------------------------------------------------------------------------
# Pallas kernel: one lane-dense tile of the transposed im2col matmul.
#   w_ref : (Cp, K)   conv weight as matmul matrix (VMEM-resident across tiles)
#   b_ref : (Cp, 1)   bias column               (VMEM-resident across tiles)
#   p_ref : (K, TN)   im2col patches for TN output pixels (streamed)
#   o_ref : (Cp, TN)  conv output, pixel axis on lanes
# ----------------------------------------------------------------------------
def conv_matmul_kernel(w_ref, b_ref, p_ref, o_ref):
    o_ref[...] = (
        jnp.dot(w_ref[...], p_ref[...], preferred_element_type=jnp.float32)
        + b_ref[...]
    ).astype(o_ref.dtype)


# ----------------------------------------------------------------------------
# Wrapper-side transposed im2col for a 3x3 / stride-2 / pad-1 conv (XLA glue).
# Row ordering of the 9C axis is (c_in, kh, kw)  ->  matches weight.reshape(C, 9C).
# ----------------------------------------------------------------------------
def _im2col_T_stride2(x_nchw):
    """x: (B, C, H, W) -> (patches_T (9C, B*Ho*Wo), Ho, Wo)."""
    B, C, H, W = x_nchw.shape
    Ho = (H + 2 - 3) // 2 + 1
    Wo = (W + 2 - 3) // 2 + 1
    xp = jnp.pad(x_nchw, ((0, 0), (0, 0), (1, 1), (1, 1)))
    taps = []
    for kh in range(3):
        for kw in range(3):
            taps.append(
                lax.slice(
                    xp,
                    (0, 0, kh, kw),
                    (B, C, kh + 2 * (Ho - 1) + 1, kw + 2 * (Wo - 1) + 1),
                    (1, 1, 2, 2),
                )
            )
    t = jnp.stack(taps, axis=0)                 # (9, B, C, Ho, Wo), tap = kh*3+kw
    t = jnp.transpose(t, (2, 0, 1, 3, 4))       # (C, 9, B, Ho, Wo)
    return t.reshape(9 * C, B * Ho * Wo), Ho, Wo


def downsample_forward(params, x, t=None):
    """Downsample.forward(x, t): Conv2d(C, C, 3, stride=2, padding=1). x: NCHW."""
    del t  # the module ignores the timestep embedding
    B, C, H, W = x.shape
    x = x.astype(jnp.float32)
    patches_T, Ho, Wo = _im2col_T_stride2(x)    # (K, N), K = 9C, N = B*Ho*Wo
    K = 9 * C
    N = B * Ho * Wo

    w_mat = params["w_mat"]                     # (Cp, K), Cp = round_up(C, 8)
    b_col = params["b_col"]                     # (Cp, 1)
    Cp = w_mat.shape[0]

    # Lane-dense tiling over the fused output-pixel axis (multiple of 128 lanes).
    TN = min(1024, _round_up(N, 128))
    N_pad = _round_up(N, TN)
    if N_pad != N:
        patches_T = jnp.pad(patches_T, ((0, 0), (0, N_pad - N)))

    out = pl.pallas_call(
        conv_matmul_kernel,
        out_shape=jax.ShapeDtypeStruct((Cp, N_pad), jnp.float32),
        grid_spec=pltpu.PrefetchScalarGridSpec(
            num_scalar_prefetch=0,
            grid=(N_pad // TN,),
            in_specs=[
                pl.BlockSpec((Cp, K), lambda i: (0, 0)),   # weight: VMEM-resident
                pl.BlockSpec((Cp, 1), lambda i: (0, 0)),   # bias:   VMEM-resident
                pl.BlockSpec((K, TN), lambda i: (0, i)),   # patches: streamed
            ],
            out_specs=pl.BlockSpec((Cp, TN), lambda i: (0, i)),
        ),
        compiler_params=pltpu.CompilerParams(
            dimension_semantics=("parallel",)),
    )(w_mat, b_col, patches_T)

    y = out[:C, :N].reshape(C, B, Ho, Wo)
    return jnp.transpose(y, (1, 0, 2, 3))       # back to NCHW


# ----------------------------------------------------------------------------
# Parameter construction (matches torch.nn.Conv2d default init bounds).
# ----------------------------------------------------------------------------
def init_params(key, n_channels):
    fan_in = n_channels * 9
    bound = 1.0 / math.sqrt(fan_in)
    k1, k2 = jax.random.split(key)
    weight = jax.random.uniform(k1, (n_channels, n_channels, 3, 3),
                                minval=-bound, maxval=bound, dtype=jnp.float32)
    bias = jax.random.uniform(k2, (n_channels,),
                              minval=-bound, maxval=bound, dtype=jnp.float32)
    # (C_out, C_in, kh, kw) -> (C_out, 9*C_in) with (c_in, kh, kw) ordering,
    # matching the im2col row ordering above; pad C_out to a sublane multiple.
    Cp = _round_up(n_channels, 8)
    w_mat = weight.reshape(n_channels, 9 * n_channels)
    w_mat = jnp.pad(w_mat, ((0, Cp - n_channels), (0, 0)))
    b_col = jnp.pad(bias[:, None], ((0, Cp - n_channels), (0, 0)))
    return {
        "weight": weight,                 # OIHW, for the reference conv
        "bias": bias,
        "w_mat": jnp.asarray(w_mat, jnp.float32),
        "b_col": jnp.asarray(b_col, jnp.float32),
    }


# ----------------------------------------------------------------------------
# Pure-JAX reference (XLA conv) for verification.
# ----------------------------------------------------------------------------
def reference_forward(params, x):
    y = lax.conv_general_dilated(
        x.astype(jnp.float32), params["weight"],
        window_strides=(2, 2), padding=((1, 1), (1, 1)),
        dimension_numbers=("NCHW", "OIHW", "NCHW"))
    return y + params["bias"][None, :, None, None]


if __name__ == "__main__":
    B, C, H, W = 2, 4, 16, 16               # small shapes consistent with the module
    key = jax.random.PRNGKey(0)
    kp, kx = jax.random.split(key)
    params = init_params(kp, C)
    x = jax.random.normal(kx, (B, C, H, W), dtype=jnp.float32)

    fwd = jax.jit(downsample_forward)
    y = fwd(params, x)
    jax.block_until_ready(y)

    y_ref = reference_forward(params, x)
    assert y.shape == (B, C, H // 2, W // 2)
    assert jnp.allclose(y, y_ref, atol=1e-5, rtol=1e-5)

    print("KERNEL_OK")
</pallas_src>

<mosaic_0001>
module attributes {stable_mosaic.version = 11 : i64} {
  func.func @conv_matmul_kernel(%arg0: i32, %arg1: memref<8x36xf32, #tpu.memory_space<vmem>>, %arg2: memref<8x1xf32, #tpu.memory_space<vmem>>, %arg3: memref<36x128xf32, #tpu.memory_space<vmem>>, %arg4: memref<8x128xf32, #tpu.memory_space<vmem>>) attributes {dimension_semantics = [#tpu.dimension_semantics<parallel>], iteration_bounds = array<i64: 1>, scalar_prefetch = 0 : i64, scratch_operands = 0 : i64, tpu.core_type = #tpu.core_type<tc>, window_params = [{pipeline_mode = #tpu.pipeline_mode<synchronous>, transform_indices = @transform_0, window_bounds = array<i64: 8, 36>}, {pipeline_mode = #tpu.pipeline_mode<synchronous>, transform_indices = @transform_1, window_bounds = array<i64: 8, 1>}, {transform_indices = @transform_2, window_bounds = array<i64: 36, 128>}, {transform_indices = @transform_3, window_bounds = array<i64: 8, 128>}]} {
    %c0 = arith.constant 0 : index
    %c0_0 = arith.constant 0 : index
    %0 = vector.load %arg1[%c0, %c0_0] : memref<8x36xf32, #tpu.memory_space<vmem>>, vector<8x36xf32>
    %c0_1 = arith.constant 0 : index
    %c0_2 = arith.constant 0 : index
    %1 = vector.load %arg3[%c0_1, %c0_2] : memref<36x128xf32, #tpu.memory_space<vmem>>, vector<36x128xf32>
    %cst = arith.constant dense<0.000000e+00> : vector<8x128xf32>
    %2 = tpu.matmul %0, %1, %cst {dimension_numbers = #tpu.dot_dimension_numbers<[1], [0], [0], [1], [0, 0, 1, 1], [], []>} : vector<8x36xf32>, vector<36x128xf32>, vector<8x128xf32> -> vector<8x128xf32>
    %c0_3 = arith.constant 0 : index
    %c0_4 = arith.constant 0 : index
    %3 = vector.load %arg2[%c0_3, %c0_4] : memref<8x1xf32, #tpu.memory_space<vmem>>, vector<8x1xf32>
    %4 = vector.broadcast %3 : vector<8x1xf32> to vector<8x128xf32>
    %5 = arith.addf %2, %4 : vector<8x128xf32>
    %c0_5 = arith.constant 0 : index
    %c0_6 = arith.constant 0 : index
    %6 = vector.load %arg4[%c0_5, %c0_6] : memref<8x128xf32, #tpu.memory_space<vmem>>, vector<8x128xf32>
    tpu.vector_store %arg4[%c0_5, %c0_6], %5 {strides = array<i32>} : memref<8x128xf32, #tpu.memory_space<vmem>>, vector<8x128xf32>,
    return
  }
  func.func @transform_0(%arg0: i32) -> (i32, i32) {
    %c0_i32 = arith.constant 0 : i32
    %c0_i32_0 = arith.constant 0 : i32
    %c0_i32_1 = arith.constant 0 : i32
    return %c0_i32, %c0_i32_0 : i32, i32
  }
  func.func @transform_1(%arg0: i32) -> (i32, i32) {
    %c0_i32 = arith.constant 0 : i32
    %c0_i32_0 = arith.constant 0 : i32
    %c0_i32_1 = arith.constant 0 : i32
    return %c0_i32, %c0_i32_0 : i32, i32
  }
  func.func @transform_2(%arg0: i32) -> (i32, i32) {
    %c0_i32 = arith.constant 0 : i32
    %c0_i32_0 = arith.constant 0 : i32
    return %c0_i32, %arg0 : i32, i32
  }
  func.func @transform_3(%arg0: i32) -> (i32, i32) {
    %c0_i32 = arith.constant 0 : i32
    %c0_i32_0 = arith.constant 0 : i32
    return %c0_i32, %arg0 : i32, i32
  }
}

</mosaic_0001>

<llo_original>
// kernel: downsample_forward.1
$region0: #{downsample_forward.1}
  #allocation0 [shape = 'u32[]', space=smem, size = 0x4, offset = 0x4, fixed_abs, tag = 'smem constant byte address 0x4 - core index']
  #allocation1 [shape = 'u32[144,128]{1,0:T(1,128)}', space=vmem, size = 0x12000, scoped, tag = 'internal scratch']
  %s0 = inlined_call_operand.vmem [shape: f32[8,36], index: 0, kind: input, shape index: {}]
  %s1 = inlined_call_operand.vmem [shape: f32[8,1], index: 1, kind: input, shape index: {}]
  %s2 = inlined_call_operand.vmem [shape: f32[36,128], index: 2, kind: input, shape index: {}]
  %s3 = inlined_call_operand.vmem [shape: f32[8,128], index: 3, kind: output, shape index: {}]
  %s4 = sld [smem:[#allocation0]]
  $region22: #{downsample_forward.1} parent=0
    _
  %s6 = ssub.s32 1, %s4
  %s7 = scalar_select 0, %s6, %s4
  // Predicated region
  $region2: #{downsample_forward.1} parent=0 // pred_check
    _
  $region3: #{downsample_forward.1} parent=0 // pred_check_branch
    %9 = sbr.rel (0) target = $region5
  $region4: #{downsample_forward.1} parent=0 // pred_region
    _
  $region5: #{downsample_forward.1} parent=0 // pred_fallthru
    _
  // Predicated region
  $region6: #{downsample_forward.1} parent=0 // pred_check
    _
  $region7: #{downsample_forward.1} parent=0 // pred_check_branch
    %11 = sbr.rel (0) target = $region9
  $region8: #{downsample_forward.1} parent=0 // pred_region
    _
  $region9: #{downsample_forward.1} parent=0 // pred_fallthru
    _
  // Predicated region
  $region10: #{downsample_forward.1} parent=0 // pred_check
    _
  $region11: #{downsample_forward.1} parent=0 // pred_check_branch
    %13 = sbr.rel (0) target = $region13
  $region12: #{downsample_forward.1} parent=0 // pred_region
    _
  $region13: #{downsample_forward.1} parent=0 // pred_fallthru
    _
  %v14 = vld [vmem:[%s0] sm:$0xff]
  %v15 = vld [vmem:[%s2] sm:$0xff]
  %v16 = vld [vmem:[%s2 + $0x8] sm:$0xff]
  %v17 = vld [vmem:[%s2 + $0x10] sm:$0xff]
  %v18 = vld [vmem:[%s2 + $0x18] sm:$0xff]
  %v19 = vld [vmem:[%s2 + $0x20] sm:$0xf]
  %v20 = vld [vmem:[%s1] sm:$0xff]
  %22 = vset.pattern.permute.xlu0 0
  %23 = vperm.xlu0 %22, %v20
  %v24 = vpop.permute.xlu0 %23
  %vm26 = vcmask 293888
  %v28 = vsel %vm26, %v14, 0
  %vm30 = vcmask 1043456
  %v32 = vsel %vm30, %v19, 0
  %34 = vmatprep.subr.mxu0 0.0
  %35 = vmatpush1.msra.mxu0 %v15
  %36 = vmatprep.subr.mxu0 0.0
  %37 = vmatpush1.msra.mxu0 %v16
  %38 = vmatprep.subr.mxu0 0.0
  %39 = vmatpush1.msra.mxu0 %v17
  %40 = vmatprep.subr.mxu0 0.0
  %41 = vmatpush1.msra.mxu0 %v18
  %42 = vmatprep.subr.mxu0 0.0
  %43 = vmatpush1.msra.mxu0 %v32
  %44 = vmatprep.subr.mxu0 0.0
  %45 = vmatpush1.msra.mxu0 0.0
  %46 = vmatprep.subr.mxu0 0.0
  %47 = vmatpush1.msra.mxu0 0.0
  %48 = vmatprep.subr.mxu0 0.0
  %49 = vmatpush1.msra.mxu0 0.0
  %50 = vmatprep.subr.mxu0 0.0
  %51 = vmatpush1.msra.mxu0 0.0
  %52 = vmatprep.subr.mxu0 0.0
  %53 = vmatpush1.msra.mxu0 0.0
  %54 = vmatprep.subr.mxu0 0.0
  %55 = vmatpush1.msra.mxu0 0.0
  %56 = vmatprep.subr.mxu0 0.0
  %57 = vmatpush1.msra.mxu0 0.0
  %58 = vmatprep.subr.mxu0 0.0
  %59 = vmatpush1.msra.mxu0 0.0
  %60 = vmatprep.subr.mxu0 0.0
  %61 = vmatpush1.msra.mxu0 0.0
  %62 = vmatprep.subr.mxu0 0.0
  %63 = vmatpush1.msra.mxu0 0.0
  %64 = vmatprep.subr.mxu0 0.0
  %65 = vmatpush1.msra.mxu0 0.0
  %66 = vmatprep.subr.mxu0 0.0
  %67 = vmatpush1.msra.mxu0 0.0
  %68 = vmatprep.subr.mxu0 0.0
  %69 = vmatpush1.msra.mxu0 0.0
  %70 = vmatprep.subr.mxu0 0.0
  %71 = vmatpush1.msra.mxu0 0.0
  %72 = vmatprep.subr.mxu0 0.0
  %73 = vmatpush1.msra.mxu0 0.0
  %74 = vmatprep.subr.mxu0 0.0
  %75 = vmatpush1.msra.mxu0 0.0
  %76 = vmatprep.subr.mxu0 0.0
  %77 = vmatpush1.msra.mxu0 0.0
  %78 = vmatprep.subr.mxu0 0.0
  %79 = vmatpush1.msra.mxu0 0.0
  %80 = vmatprep.subr.mxu0 0.0
  %81 = vmatpush1.msra.mxu0 0.0
  %82 = vmatprep.subr.mxu0 0.0
  %83 = vmatpush1.msra.mxu0 0.0
  %84 = vmatprep.subr.mxu0 0.0
  %85 = vmatpush1.msra.mxu0 0.0
  %86 = vmatprep.subr.mxu0 0.0
  %87 = vmatpush1.msra.mxu0 0.0
  %88 = vmatprep.subr.mxu0 0.0
  %89 = vmatpush1.msra.mxu0 0.0
  %90 = vmatprep.subr.mxu0 0.0
  %91 = vmatpush1.msra.mxu0 0.0
  %92 = vmatprep.subr.mxu0 0.0
  %93 = vmatpush1.msra.mxu0 0.0
  %94 = vmatprep.subr.mxu0 0.0
  %95 = vmatpush1.msra.mxu0 0.0
  %96 = vmatprep.subr.mxu0 0.0
  %97 = vmatpush1.msra.mxu0 0.0
  %98 = vmatprep.mubr.f32.mxu0 0.0
  %99 = vmatmul.mubr.f32.gmra.mrb[0].mxu0 %v28
  %v100 = vpop.f32.mrb[0].mxu0
  %v101 = vadd.f32 %v24, %v100
  %v102 = vpop.f32.mrb[0].mxu0
  %103 = vdwg.mxu0
  %104 = vst [vmem:[%s3] sm:$0xff] %v101
  // Predicated region
  $region14: #{downsample_forward.1} parent=0 // pred_check
    _
  $region15: #{downsample_forward.1} parent=0 // pred_check_branch
    %106 = sbr.rel (0) target = $region17
  $region16: #{downsample_forward.1} parent=0 // pred_region
    _
  $region17: #{downsample_forward.1} parent=0 // pred_fallthru
    _
  // Predicated region
  $region18: #{downsample_forward.1} parent=0 // pred_check
    _
  $region19: #{downsample_forward.1} parent=0 // pred_check_branch
    %108 = sbr.rel (0) target = $region21
  $region20: #{downsample_forward.1} parent=0 // pred_region
    _
  $region21: #{downsample_forward.1} parent=0 // pred_fallthru
    _

</llo_original>
